<compile_context>
chip_gen: v5e
topology: v5e:2x2
jax: 0.10.0
libtpu: 0.0.40
codegen_flags: <defaults>
</compile_context>

<pallas_src>
import jax
import jax.numpy as jnp
from jax.experimental import pallas as pl
from jax.experimental.pallas import tpu as pltpu


def _round_up(n, m):
    return ((n + m - 1) // m) * m


def qnet_kernel(x_ref, w1_ref, b1_ref, w2_ref, b2_ref, o_ref):
    # x_ref:  (TILE_B, S) bf16      w1_ref: (S, H) bf16   b1_ref: (1, H) f32
    # w2_ref: (H, A) bf16           b2_ref: (1, A) f32    o_ref:  (TILE_B, A) f32
    x = x_ref[...]
    # First matmul on the MXU, f32 accumulation.
    h = jnp.dot(x, w1_ref[...], preferred_element_type=jnp.float32)      # (TILE_B, H) f32
    # Epilogue in f32 on the accumulator (bias + ReLU on the VPU).
    h = jnp.maximum(h + b1_ref[...], 0.0)
    # Second matmul: cast activation to bf16 for the MXU, accumulate in f32.
    o = jnp.dot(h.astype(w2_ref.dtype), w2_ref[...],
                preferred_element_type=jnp.float32)                      # (TILE_B, A) f32
    o_ref[...] = (o + b2_ref[...]).astype(o_ref.dtype)


def prepare_qnet_params(w1, b1, w2, b2):
    """One-time weight prep (call when the net / target net is updated).

    w1: (S, H), b1: (H,) or (1, H), w2: (H, A), b2: (A,) or (1, A), stored as (in, out).
    Matmul weights are cast to bf16 for the MXU; biases stay f32 for the epilogue.
    """
    return (
        jnp.asarray(w1, jnp.bfloat16),
        jnp.asarray(b1, jnp.float32).reshape(1, -1),
        jnp.asarray(w2, jnp.bfloat16),
        jnp.asarray(b2, jnp.float32).reshape(1, -1),
    )


def qnet_forward(x, params, *, tile_b=1024):
    """Fused MLP forward.  x: (B, S) float32, params from prepare_qnet_params().

    Returns (B, A) float32.  On v7x with very large B, pass tile_b ~= B/2..B/4 so
    the "parallel" batch grid is sharded across both TensorCores.
    """
    w1, b1, w2, b2 = params
    B, S = x.shape
    H = w1.shape[1]
    A = w2.shape[1]
    assert w1.shape == (S, H) and b1.shape == (1, H)
    assert w2.shape == (H, A) and b2.shape == (1, A)

    # Batch tile: multiple of 16 (bf16 sublane packing), never larger than needed.
    tile_b = max(16, _round_up(min(tile_b, B), 16))
    B_pad = _round_up(B, tile_b)

    # Only the batch axis is padded (zeros); feature dims keep their real sizes.
    xb = x.astype(jnp.bfloat16)
    if B_pad != B:
        xb = jnp.zeros((B_pad, S), jnp.bfloat16).at[:B].set(xb)

    grid = (B_pad // tile_b,)

    out_padded = pl.pallas_call(
        qnet_kernel,
        out_shape=jax.ShapeDtypeStruct((B_pad, A), jnp.float32),
        grid_spec=pltpu.PrefetchScalarGridSpec(
            num_scalar_prefetch=0,
            grid=grid,
            in_specs=[
                # x tile marches over the batch; weights/biases stay VMEM-resident.
                pl.BlockSpec((tile_b, S), lambda i: (i, 0)),
                pl.BlockSpec((S, H), lambda i: (0, 0)),
                pl.BlockSpec((1, H), lambda i: (0, 0)),
                pl.BlockSpec((H, A), lambda i: (0, 0)),
                pl.BlockSpec((1, A), lambda i: (0, 0)),
            ],
            out_specs=pl.BlockSpec((tile_b, A), lambda i: (i, 0)),
        ),
        compiler_params=pltpu.CompilerParams(
            dimension_semantics=("parallel",),
        ),
    )(xb, w1, b1, w2, b2)

    return out_padded[:B] if B_pad != B else out_padded


def reference_forward_bf16(x, w1, b1, w2, b2):
    """Reference with the same bf16-input / f32-accumulate numerics as the kernel."""
    h = jnp.dot(x.astype(jnp.bfloat16), w1.astype(jnp.bfloat16),
                preferred_element_type=jnp.float32) + b1
    h = jnp.maximum(h, 0.0)
    o = jnp.dot(h.astype(jnp.bfloat16), w2.astype(jnp.bfloat16),
                preferred_element_type=jnp.float32) + b2
    return o


if __name__ == "__main__":
    # Shapes consistent with the module: state_dim=16, hidden_dim=32, action_dim=4.
    S, H, A = 16, 32, 4

    key = jax.random.PRNGKey(0)
    kx, k1, k2, k3, k4, kx2 = jax.random.split(key, 6)

    # PyTorch-default-style init U(-1/sqrt(fan_in), 1/sqrt(fan_in)),
    # stored as (in_features, out_features) so the kernel computes x @ W + b.
    bound1 = 1.0 / jnp.sqrt(S)
    w1 = jax.random.uniform(k1, (S, H), minval=-bound1, maxval=bound1, dtype=jnp.float32)
    b1 = jax.random.uniform(k2, (1, H), minval=-bound1, maxval=bound1, dtype=jnp.float32)
    bound2 = 1.0 / jnp.sqrt(H)
    w2 = jax.random.uniform(k3, (H, A), minval=-bound2, maxval=bound2, dtype=jnp.float32)
    b2 = jax.random.uniform(k4, (1, A), minval=-bound2, maxval=bound2, dtype=jnp.float32)

    # One-time weight prep (bf16 cast), hoisted out of the per-step forward.
    params = prepare_qnet_params(w1, b1, w2, b2)

    # Small batch (single grid step, batch rows padded 8 -> 16).
    B = 8
    x = jax.random.normal(kx, (B, S), dtype=jnp.float32)
    out = jax.block_until_ready(qnet_forward(x, params))
    ref = reference_forward_bf16(x, w1, b1, w2, b2)
    assert out.shape == (B, A)
    assert jnp.allclose(out, ref, atol=2e-2, rtol=2e-2), "Pallas output mismatch vs reference (B=8)"

    # Larger batch exercising the batch grid / resident-weight pipelining (2 grid steps).
    B2 = 2048
    x2 = jax.random.normal(kx2, (B2, S), dtype=jnp.float32)
    out2 = jax.block_until_ready(qnet_forward(x2, params, tile_b=1024))
    ref2 = reference_forward_bf16(x2, w1, b1, w2, b2)
    assert out2.shape == (B2, A)
    assert jnp.allclose(out2, ref2, atol=2e-2, rtol=2e-2), "Pallas output mismatch vs reference (B=2048)"

    print("KERNEL_OK")
</pallas_src>

<mosaic_0001>
module attributes {stable_mosaic.version = 11 : i64} {
  func.func @qnet_kernel(%arg0: i32, %arg1: memref<16x16xbf16, #tpu.memory_space<vmem>>, %arg2: memref<16x32xbf16, #tpu.memory_space<vmem>>, %arg3: memref<1x32xf32, #tpu.memory_space<vmem>>, %arg4: memref<32x4xbf16, #tpu.memory_space<vmem>>, %arg5: memref<1x4xf32, #tpu.memory_space<vmem>>, %arg6: memref<16x4xf32, #tpu.memory_space<vmem>>) attributes {dimension_semantics = [#tpu.dimension_semantics<parallel>], iteration_bounds = array<i64: 1>, scalar_prefetch = 0 : i64, scratch_operands = 0 : i64, tpu.core_type = #tpu.core_type<tc>, window_params = [{transform_indices = @transform_0, window_bounds = array<i64: 16, 16>}, {pipeline_mode = #tpu.pipeline_mode<synchronous>, transform_indices = @transform_1, window_bounds = array<i64: 16, 32>}, {pipeline_mode = #tpu.pipeline_mode<synchronous>, transform_indices = @transform_2, window_bounds = array<i64: 1, 32>}, {pipeline_mode = #tpu.pipeline_mode<synchronous>, transform_indices = @transform_3, window_bounds = array<i64: 32, 4>}, {pipeline_mode = #tpu.pipeline_mode<synchronous>, transform_indices = @transform_4, window_bounds = array<i64: 1, 4>}, {transform_indices = @transform_5, window_bounds = array<i64: 16, 4>}]} {
    %c0 = arith.constant 0 : index
    %c0_0 = arith.constant 0 : index
    %0 = vector.load %arg1[%c0, %c0_0] : memref<16x16xbf16, #tpu.memory_space<vmem>>, vector<16x16xbf16>
    %c0_1 = arith.constant 0 : index
    %c0_2 = arith.constant 0 : index
    %1 = vector.load %arg2[%c0_1, %c0_2] : memref<16x32xbf16, #tpu.memory_space<vmem>>, vector<16x32xbf16>
    %cst = arith.constant dense<0.000000e+00> : vector<16x32xf32>
    %2 = tpu.matmul %0, %1, %cst {dimension_numbers = #tpu.dot_dimension_numbers<[1], [0], [0], [1], [0, 0, 1, 1], [], []>} : vector<16x16xbf16>, vector<16x32xbf16>, vector<16x32xf32> -> vector<16x32xf32>
    %c0_3 = arith.constant 0 : index
    %c0_4 = arith.constant 0 : index
    %3 = vector.load %arg3[%c0_3, %c0_4] : memref<1x32xf32, #tpu.memory_space<vmem>>, vector<1x32xf32>
    %4 = vector.broadcast %3 : vector<1x32xf32> to vector<16x32xf32>
    %5 = arith.addf %2, %4 : vector<16x32xf32>
    %cst_5 = arith.constant 0.000000e+00 : f32
    %6 = vector.broadcast %cst_5 : f32 to vector<16x32xf32>
    %7 = arith.maximumf %5, %6 : vector<16x32xf32>
    %8 = arith.truncf %7 : vector<16x32xf32> to vector<16x32xbf16>
    %c0_6 = arith.constant 0 : index
    %c0_7 = arith.constant 0 : index
    %9 = vector.load %arg4[%c0_6, %c0_7] : memref<32x4xbf16, #tpu.memory_space<vmem>>, vector<32x4xbf16>
    %cst_8 = arith.constant dense<0.000000e+00> : vector<16x4xf32>
    %10 = tpu.matmul %8, %9, %cst_8 {dimension_numbers = #tpu.dot_dimension_numbers<[1], [0], [0], [1], [0, 0, 1, 1], [], []>} : vector<16x32xbf16>, vector<32x4xbf16>, vector<16x4xf32> -> vector<16x4xf32>
    %c0_9 = arith.constant 0 : index
    %c0_10 = arith.constant 0 : index
    %11 = vector.load %arg5[%c0_9, %c0_10] : memref<1x4xf32, #tpu.memory_space<vmem>>, vector<1x4xf32>
    %12 = vector.broadcast %11 : vector<1x4xf32> to vector<16x4xf32>
    %13 = arith.addf %10, %12 : vector<16x4xf32>
    %c0_11 = arith.constant 0 : index
    %c0_12 = arith.constant 0 : index
    %14 = vector.load %arg6[%c0_11, %c0_12] : memref<16x4xf32, #tpu.memory_space<vmem>>, vector<16x4xf32>
    tpu.vector_store %arg6[%c0_11, %c0_12], %13 {strides = array<i32>} : memref<16x4xf32, #tpu.memory_space<vmem>>, vector<16x4xf32>,
    return
  }
  func.func @transform_0(%arg0: i32) -> (i32, i32) {
    %c0_i32 = arith.constant 0 : i32
    %c0_i32_0 = arith.constant 0 : i32
    return %arg0, %c0_i32 : i32, i32
  }
  func.func @transform_1(%arg0: i32) -> (i32, i32) {
    %c0_i32 = arith.constant 0 : i32
    %c0_i32_0 = arith.constant 0 : i32
    %c0_i32_1 = arith.constant 0 : i32
    return %c0_i32, %c0_i32_0 : i32, i32
  }
  func.func @transform_2(%arg0: i32) -> (i32, i32) {
    %c0_i32 = arith.constant 0 : i32
    %c0_i32_0 = arith.constant 0 : i32
    %c0_i32_1 = arith.constant 0 : i32
    return %c0_i32, %c0_i32_0 : i32, i32
  }
  func.func @transform_3(%arg0: i32) -> (i32, i32) {
    %c0_i32 = arith.constant 0 : i32
    %c0_i32_0 = arith.constant 0 : i32
    %c0_i32_1 = arith.constant 0 : i32
    return %c0_i32, %c0_i32_0 : i32, i32
  }
  func.func @transform_4(%arg0: i32) -> (i32, i32) {
    %c0_i32 = arith.constant 0 : i32
    %c0_i32_0 = arith.constant 0 : i32
    %c0_i32_1 = arith.constant 0 : i32
    return %c0_i32, %c0_i32_0 : i32, i32
  }
  func.func @transform_5(%arg0: i32) -> (i32, i32) {
    %c0_i32 = arith.constant 0 : i32
    %c0_i32_0 = arith.constant 0 : i32
    return %arg0, %c0_i32 : i32, i32
  }
}

</mosaic_0001>

<llo_original>
// kernel: tpu_custom_call.1
$region0: #{tpu_custom_call.1}
  #allocation0 [shape = 'u32[]', space=smem, size = 0x4, offset = 0x4, fixed_abs, tag = 'smem constant byte address 0x4 - core index']
  #allocation1 [shape = 'u32[72,128]{1,0:T(1,128)}', space=vmem, size = 0x9000, scoped, tag = 'internal scratch']
  %s0 = inlined_call_operand.vmem [shape: bf16[16,16], index: 0, kind: input, shape index: {}]
  %s1 = inlined_call_operand.vmem [shape: bf16[16,32], index: 1, kind: input, shape index: {}]
  %s2 = inlined_call_operand.vmem [shape: f32[1,32], index: 2, kind: input, shape index: {}]
  %s3 = inlined_call_operand.vmem [shape: bf16[32,4], index: 3, kind: input, shape index: {}]
  %s4 = inlined_call_operand.vmem [shape: f32[1,4], index: 4, kind: input, shape index: {}]
  %s5 = inlined_call_operand.vmem [shape: f32[16,4], index: 5, kind: output, shape index: {}]
  %s6 = sld [smem:[#allocation0]]
  $region30: #{tpu_custom_call.1} parent=0
    _
  %s8 = ssub.s32 1, %s6
  %s9 = scalar_select 0, %s8, %s6
  // Predicated region
  $region2: #{tpu_custom_call.1} parent=0 // pred_check
    _
  $region3: #{tpu_custom_call.1} parent=0 // pred_check_branch
    %11 = sbr.rel (0) target = $region5
  $region4: #{tpu_custom_call.1} parent=0 // pred_region
    _
  $region5: #{tpu_custom_call.1} parent=0 // pred_fallthru
    _
  // Predicated region
  $region6: #{tpu_custom_call.1} parent=0 // pred_check
    _
  $region7: #{tpu_custom_call.1} parent=0 // pred_check_branch
    %13 = sbr.rel (0) target = $region9
  $region8: #{tpu_custom_call.1} parent=0 // pred_region
    _
  $region9: #{tpu_custom_call.1} parent=0 // pred_fallthru
    _
  // Predicated region
  $region10: #{tpu_custom_call.1} parent=0 // pred_check
    _
  $region11: #{tpu_custom_call.1} parent=0 // pred_check_branch
    %15 = sbr.rel (0) target = $region13
  $region12: #{tpu_custom_call.1} parent=0 // pred_region
    _
  $region13: #{tpu_custom_call.1} parent=0 // pred_fallthru
    _
  // Predicated region
  $region14: #{tpu_custom_call.1} parent=0 // pred_check
    _
  $region15: #{tpu_custom_call.1} parent=0 // pred_check_branch
    %17 = sbr.rel (0) target = $region17
  $region16: #{tpu_custom_call.1} parent=0 // pred_region
    _
  $region17: #{tpu_custom_call.1} parent=0 // pred_fallthru
    _
  // Predicated region
  $region18: #{tpu_custom_call.1} parent=0 // pred_check
    _
  $region19: #{tpu_custom_call.1} parent=0 // pred_check_branch
    %19 = sbr.rel (0) target = $region21
  $region20: #{tpu_custom_call.1} parent=0 // pred_region
    _
  $region21: #{tpu_custom_call.1} parent=0 // pred_fallthru
    _
  %v21 = vld [vmem:[%s0] sm:$0xf]
  %v22 = vld [vmem:[%s0 + $0x4] sm:$0xf]
  %v23 = vld [vmem:[%s1] sm:$0xf]
  %v24 = vld [vmem:[%s1 + $0x4] sm:$0xf]
  %v25 = vld [vmem:[%s2] sm:$0x1]
  %v27 = vperm.slane %v25, 0
  %v31 = vunpack.c.l.b16 %v21
  %v32 = vunpack.c.l.b16 %v22
  %v33 = vpack.c.b16 %v32, %v31
  %v36 = vunpack.c.l.b16 %v23
  %v37 = vunpack.c.l.b16 %v24
  %v38 = vpack.c.b16 %v37, %v36
  %vm40 = vcmask 130048
  %v42 = vsel %vm40, %v33, 0
  %44 = vmatpush.bf16.msra.mxu0 0
  %45 = vmatpush.bf16.msra.mxu0 0
  %46 = vmatpush.bf16.msra.mxu0 0
  %47 = vmatpush.bf16.msra.mxu0 0
  %48 = vmatpush.bf16.msra.mxu0 0
  %49 = vmatpush.bf16.msra.mxu0 0
  %50 = vmatpush.bf16.msra.mxu0 0
  %51 = vmatpush.bf16.msra.mxu0 %v38
  %52 = vmatmul.bf16.gmra.mxu0 %v42
  %v53 = vpop.f32.mrf.mxu0
  %v54 = vadd.f32 %v27, %v53
  %v55 = vpop.f32.mrf.mxu0
  %v56 = vadd.f32 %v27, %v55
  %57 = vdwg.mxu0
  %v58 = vmax.f32 %v54, 0.0
  %v59 = vmax.f32 %v56, 0.0
  %v60 = vpack.c.bf16 %v59, %v58
  %v61 = vld [vmem:[%s3] sm:$0xf]
  %v62 = vld [vmem:[%s3 + $0x4] sm:$0xf]
  %v63 = vld [vmem:[%s3 + $0x8] sm:$0xf]
  %v64 = vld [vmem:[%s3 + $0xc] sm:$0xf]
  %v65 = vld [vmem:[%s4] sm:$0x1]
  %v67 = vperm.slane %v65, 0
  %v73 = vunpack.c.l.b16 %v61
  %v74 = vunpack.c.l.b16 %v62
  %v75 = vunpack.c.l.b16 %v63
  %v76 = vunpack.c.l.b16 %v64
  %v77 = vpack.c.b16 %v74, %v73
  %v78 = vpack.c.b16 %v76, %v75
  %vm81 = vcmask 261120
  %v83 = vsel %vm81, %v60, 0
  %85 = vmatpush.bf16.msra.mxu0 0
  %86 = vmatpush.bf16.msra.mxu0 0
  %87 = vmatpush.bf16.msra.mxu0 0
  %88 = vmatpush.bf16.msra.mxu0 0
  %89 = vmatpush.bf16.msra.mxu0 0
  %90 = vmatpush.bf16.msra.mxu0 0
  %91 = vmatpush.bf16.msra.mxu0 %v78
  %92 = vmatpush.bf16.msra.mxu0 %v77
  %93 = vmatmul.bf16.gmra.mxu0 %v83
  %v94 = vpop.f32.mrf.mxu0
  %v95 = vadd.f32 %v67, %v94
  %v96 = vpop.f32.mrf.mxu0
  %v97 = vadd.f32 %v67, %v96
  %98 = vdwg.mxu0
  %vm99 = vcmask 31744
  %100 = vst.msk [vmem:[%s5] sm:$0xff] %vm99, %v95
  %101 = vst.msk [vmem:[%s5 + $0x8] sm:$0xff] %vm99, %v97
  // Predicated region
  $region22: #{tpu_custom_call.1} parent=0 // pred_check
    _
  $region23: #{tpu_custom_call.1} parent=0 // pred_check_branch
    %103 = sbr.rel (0) target = $region25
  $region24: #{tpu_custom_call.1} parent=0 // pred_region
    _
  $region25: #{tpu_custom_call.1} parent=0 // pred_fallthru
    _
  // Predicated region
  $region26: #{tpu_custom_call.1} parent=0 // pred_check
    _
  $region27: #{tpu_custom_call.1} parent=0 // pred_check_branch
    %105 = sbr.rel (0) target = $region29
  $region28: #{tpu_custom_call.1} parent=0 // pred_region
    _
  $region29: #{tpu_custom_call.1} parent=0 // pred_fallthru
    _

</llo_original>
